<compile_context>
chip_gen: v6e
topology: v6e:2x2x1
jax: 0.10.0
libtpu: 0.0.40
codegen_flags: <defaults>
</compile_context>

<pallas_src>
import functools
import math

import jax
import jax.numpy as jnp
from jax import lax
from jax.experimental import pallas as pl
from jax.experimental.pallas import tpu as pltpu

_MIB = 1024 * 1024
_MIN_GRID_STEPS = 8            # target >= this many grid steps (pipelining / megacore)
_MIN_BLOCK_BYTES = 512 * 1024  # but keep per-step blocks DMA-efficient


def _cdiv(a, b):
    return -(-a // b)


def _lcm(a, b):
    return a * b // math.gcd(a, b)


# ---------------------------------------------------------------------------
# 1-D bilinear interpolation matrix, following the decomposed graph exactly:
# iota -> +0.5 -> *(in/out) -> -0.5 -> clamp_min 0 -> trunc to int ->
# neighbor = min(idx+1, in-1) -> frac clamped to [0, 1].
# ---------------------------------------------------------------------------
def _bilinear_matrix(in_size: int, out_size: int) -> jnp.ndarray:
    i = jnp.arange(out_size, dtype=jnp.float32)
    scale = in_size / out_size                               # sym_size / out
    src = jnp.maximum((i + 0.5) * scale - 0.5, 0.0)          # clamp_min 0
    idx0 = src.astype(jnp.int32)                             # trunc == floor (src >= 0)
    idx1 = jnp.where(idx0 < in_size - 1, idx0 + 1, idx0)     # lt / where
    w = jnp.clip(src - idx0.astype(jnp.float32), 0.0, 1.0)   # clamp_max 1
    oh0 = jax.nn.one_hot(idx0, in_size, dtype=jnp.float32)
    oh1 = jax.nn.one_hot(idx1, in_size, dtype=jnp.float32)
    return oh0 * (1.0 - w)[:, None] + oh1 * w[:, None]       # (out, in)


# ---------------------------------------------------------------------------
# Kernels
# ---------------------------------------------------------------------------
def _fused_kernel(x_ref, w_ref, o_ref):
    # x_ref: (TC, H*W)   w_ref: (H*W, out_h*out_w)   o_ref: (TC, out_h*out_w)
    o_ref[...] = jnp.dot(
        x_ref[...], w_ref[...], preferred_element_type=jnp.float32
    ).astype(o_ref.dtype)


def _separable_kernel(x_ref, wy_ref, wxt_ref, o_ref, *, tc, h_in, out_h, unroll):
    # x_ref: (TC*H, W)  wy_ref: (out_h, H)  wxt_ref: (W, out_w_p)
    # o_ref: (TC*out_h, out_w_p)
    wy = wy_ref[...]      # hoisted out of the channel loop
    wxt = wxt_ref[...]
    cdt = wxt.dtype

    def channel(i):
        r_in = i * h_in
        r_out = i * out_h
        if not isinstance(i, int):
            r_in = pl.multiple_of(r_in, h_in)
            r_out = pl.multiple_of(r_out, out_h)
        # pass 1 (W interpolation): (H, W) @ (W, out_w_p)
        t = jnp.dot(x_ref[pl.ds(r_in, h_in), :], wxt,
                    preferred_element_type=jnp.float32)
        # pass 2 (H interpolation): (out_h, H) @ (H, out_w_p)
        o_ref[pl.ds(r_out, out_h), :] = jnp.dot(
            wy, t.astype(cdt), preferred_element_type=jnp.float32
        ).astype(o_ref.dtype)

    # Channel loop, manually unrolled in chunks so consecutive channels'
    # MXU pushes / result stores can overlap.
    n_main = tc // unroll
    if n_main > 0:
        def body(c, carry):
            base = pl.multiple_of(c * unroll, unroll)
            for u in range(unroll):
                channel(base + u)
            return carry
        lax.fori_loop(0, n_main, body, 0)
    for i in range(n_main * unroll, tc):      # static remainder
        channel(i)


# ---------------------------------------------------------------------------
# Generation-aware VMEM / tile budgeting
# ---------------------------------------------------------------------------
def _vmem_capacity_bytes() -> int:
    try:
        return int(pltpu.get_tpu_info().vmem_capacity_bytes)
    except Exception:
        return 64 * _MIB      # conservative (v7x-sized) fallback


def _vmem_limit(est_bytes: int, cap_bytes: int) -> int:
    hi = int(cap_bytes) * 9 // 10
    return int(min(max(min(32 * _MIB, hi), est_bytes * 5 // 4), hi))


def _choose_nc_tile(nc, per_channel_bytes, budget_bytes, row_align, min_steps):
    per = max(int(per_channel_bytes), 1)
    tc_budget = max(1, int(budget_bytes) // per)
    # Target >= min_steps grid steps (DMA/compute overlap, both TCs on v7x),
    # but never shrink blocks below a DMA-efficient floor, and still prefer
    # >= 2 steps whenever the problem allows it.
    tc_floor = max(1, _cdiv(_MIN_BLOCK_BYTES, per))
    tc_steps = max(_cdiv(nc, min_steps), min(tc_floor, _cdiv(nc, 2)))
    tc = min(tc_budget, tc_steps, nc)
    if tc >= nc:
        return nc
    # Keep blocked second-minor dims (8/16)-aligned.
    # TODO(synk): for huge spatial sizes whose H is not 8-aligned, split the W
    # axis instead of rounding TC up past the budget.
    tc = max(row_align, (tc // row_align) * row_align)
    return min(tc, nc)


def _even_steps_nudge(nc, tc, row_align):
    """Prefer an even grid step count so v7x's two TensorCores stay balanced."""
    if tc >= nc:
        return tc
    steps = _cdiv(nc, tc)
    if steps <= 1 or steps % 2 == 0:
        return tc
    cand = _cdiv(_cdiv(nc, steps + 1), row_align) * row_align
    if 0 < cand <= tc and _cdiv(nc, cand) % 2 == 0:
        return cand
    return tc


# ---------------------------------------------------------------------------
# Grid-invariant weight operands: request single-buffering (saves VMEM),
# falling back transparently if this Pallas version rejects it.
# ---------------------------------------------------------------------------
def _const_spec(block_shape, mode):
    index_map = lambda *_: (0,) * len(block_shape)
    if mode is None:
        return pl.BlockSpec(block_shape, index_map)
    return pl.BlockSpec(block_shape, index_map, pipeline_mode=mode)


def _run_const_single_buffered(run_fn):
    if hasattr(pl, "Buffered"):
        try:
            return run_fn(pl.Buffered(1))
        except Exception:
            pass
    return run_fn(None)


# ---------------------------------------------------------------------------
# Wrapper
# ---------------------------------------------------------------------------
def upsample_bilinear2d(
    x: jnp.ndarray,
    out_h: int,
    out_w: int,
    *,
    compute_dtype=jnp.float32,          # bf16 recommended on v5e when tolerance allows
    tile_budget_bytes=None,
    fused_weight_limit_bytes=None,
) -> jnp.ndarray:
    """x: (N, C, H, W) float32 -> (N, C, out_h, out_w) float32."""
    N, C, H, W = x.shape
    NC = N * C
    out_hw = out_h * out_w
    out_dtype = x.dtype
    cbytes = jnp.dtype(compute_dtype).itemsize

    vmem_cap = _vmem_capacity_bytes()
    hard_cap = vmem_cap * 85 // 100
    if tile_budget_bytes is None:
        # ~25 MiB on v5e/v6e (128 MiB VMEM), ~12 MiB on v7x (64 MiB VMEM).
        tile_budget_bytes = max(4 * _MIB, vmem_cap // 5)
    lane_dense = (out_w % 128 == 0)
    if fused_weight_limit_bytes is None:
        # Larger limit when out_w is not lane-dense: the fused path's merged
        # (out_h*out_w) output avoids masked partial stores.
        fused_weight_limit_bytes = vmem_cap // 16 if lane_dense else vmem_cap // 8

    wy32 = _bilinear_matrix(H, out_h)        # (out_h, H)
    wx32 = _bilinear_matrix(W, out_w)        # (out_w, W)
    fused_weight_bytes = H * W * out_hw * cbytes

    if fused_weight_bytes <= fused_weight_limit_bytes:
        # -------- FUSED single-matmul path (small spatial sizes) -----------
        # W_full[(ih*W+iw), (oh*out_w+ow)] = Wy[oh,ih] * Wx[ow,iw]
        w_full = jnp.einsum("ah,bw->hwab", wy32, wx32).reshape(
            H * W, out_hw).astype(compute_dtype)
        x2 = x.reshape(NC, H * W).astype(compute_dtype)

        row_align = 8 if cbytes == 4 else 16
        per_c = 2 * H * W * cbytes + 2 * out_hw * 4        # 2x-buffered in/out
        fixed = 2 * fused_weight_bytes                      # weight (conservative 2x)
        streamed = max(min(tile_budget_bytes, hard_cap - fixed), per_c)
        TC = _choose_nc_tile(NC, per_c, streamed, row_align, _MIN_GRID_STEPS)
        TC = _even_steps_nudge(NC, TC, row_align)
        grid = (pl.cdiv(NC, TC),)
        est = TC * per_c + fixed + _MIB

        def run(const_mode):
            return pl.pallas_call(
                _fused_kernel,
                out_shape=jax.ShapeDtypeStruct((NC, out_hw), jnp.float32),
                grid_spec=pltpu.PrefetchScalarGridSpec(
                    num_scalar_prefetch=0,
                    grid=grid,
                    in_specs=[
                        pl.BlockSpec((TC, H * W), lambda i: (i, 0)),
                        _const_spec((H * W, out_hw), const_mode),
                    ],
                    out_specs=pl.BlockSpec((TC, out_hw), lambda i: (i, 0)),
                ),
                compiler_params=pltpu.CompilerParams(
                    dimension_semantics=("parallel",),
                    vmem_limit_bytes=_vmem_limit(est, vmem_cap)),
            )(x2, w_full)

        out2 = _run_const_single_buffered(run)
        return out2.reshape(N, C, out_h, out_w).astype(out_dtype)

    # ------------ SEPARABLE two-pass path (larger spatial sizes) ----------
    # Pad the output lane dim to a multiple of 128 so every store is unmasked;
    # the pad is computed from zero weight columns and sliced off on the host.
    out_w_p = out_w if lane_dense else _cdiv(out_w, 128) * 128
    wy = wy32.astype(compute_dtype)                 # (out_h, H)
    wxt = wx32.T.astype(compute_dtype)              # (W, out_w)  pre-transposed
    if out_w_p != out_w:
        wxt = jnp.pad(wxt, ((0, 0), (0, out_w_p - out_w)))
    x2 = x.reshape(NC * H, W).astype(compute_dtype)

    sub_in = 8 * (4 // cbytes)                      # sublane tile of compute dtype
    row_align = _lcm(sub_in // math.gcd(H, sub_in), 8 // math.gcd(out_h, 8))
    inter = H * out_w_p * 4                         # per-channel f32 intermediate
    u_cap = 4 if inter <= _MIB else 2
    per_c = 2 * H * W * cbytes + 2 * out_h * out_w_p * 4
    fixed = 2 * (out_h * H + W * out_w_p) * cbytes + u_cap * inter
    streamed = max(min(tile_budget_bytes, hard_cap - fixed), per_c)
    TC = _choose_nc_tile(NC, per_c, streamed, row_align, _MIN_GRID_STEPS)
    TC = _even_steps_nudge(NC, TC, row_align)
    grid = (pl.cdiv(NC, TC),)
    unroll = max(1, min(TC, u_cap))
    est = TC * per_c + fixed + _MIB

    kernel = functools.partial(_separable_kernel, tc=TC, h_in=H, out_h=out_h,
                               unroll=unroll)

    def run(const_mode):
        return pl.pallas_call(
            kernel,
            out_shape=jax.ShapeDtypeStruct((NC * out_h, out_w_p), jnp.float32),
            grid_spec=pltpu.PrefetchScalarGridSpec(
                num_scalar_prefetch=0,
                grid=grid,
                in_specs=[
                    pl.BlockSpec((TC * H, W), lambda i: (i, 0)),
                    _const_spec((out_h, H), const_mode),
                    _const_spec((W, out_w_p), const_mode),
                ],
                out_specs=pl.BlockSpec((TC * out_h, out_w_p), lambda i: (i, 0)),
            ),
            compiler_params=pltpu.CompilerParams(
                dimension_semantics=("parallel",),
                vmem_limit_bytes=_vmem_limit(est, vmem_cap)),
        )(x2, wy, wxt)

    out2 = _run_const_single_buffered(run)
    if out_w_p != out_w:
        out2 = out2[:, :out_w]
    return out2.reshape(N, C, out_h, out_w).astype(out_dtype)


def repro_forward(arg0_1, arg1_1, arg2_1, arg3_1, arg4_1, arg5_1):
    """Mirrors Repro.forward. arg0_1/arg1_1/arg2_1 are unused by the graph."""
    del arg0_1, arg1_1, arg2_1
    return (upsample_bilinear2d(arg3_1, int(arg4_1), int(arg5_1)),)


# ---------------------------------------------------------------------------
# Pure-JAX reference mirroring the fx graph (gather 4 corners + lerp).
# ---------------------------------------------------------------------------
def _reference(x, out_h, out_w):
    N, C, H, W = x.shape
    iy = jnp.arange(out_h, dtype=jnp.float32)
    ix = jnp.arange(out_w, dtype=jnp.float32)
    sy = jnp.maximum((iy + 0.5) * (H / out_h) - 0.5, 0.0)
    sx = jnp.maximum((ix + 0.5) * (W / out_w) - 0.5, 0.0)
    y0 = sy.astype(jnp.int32)
    x0 = sx.astype(jnp.int32)
    y1 = jnp.where(y0 < H - 1, y0 + 1, y0)
    x1 = jnp.where(x0 < W - 1, x0 + 1, x0)
    wy = jnp.clip(sy - y0.astype(jnp.float32), 0.0, 1.0)[:, None]
    wx = jnp.clip(sx - x0.astype(jnp.float32), 0.0, 1.0)[None, :]
    v00 = x[:, :, y0[:, None], x0[None, :]]
    v01 = x[:, :, y0[:, None], x1[None, :]]
    v10 = x[:, :, y1[:, None], x0[None, :]]
    v11 = x[:, :, y1[:, None], x1[None, :]]
    top = v00 + (v01 - v00) * wx
    bot = v10 + (v11 - v10) * wx
    return top + (bot - top) * wy


if __name__ == "__main__":
    root = jax.random.PRNGKey(0)
    keys = jax.random.split(root, 8)

    def run_case(key, n, c, h, w, oh, ow, *, atol=1e-5, rtol=1e-5, **kwargs):
        x = jax.random.normal(key, (n, c, h, w), dtype=jnp.float32)
        y = upsample_bilinear2d(x, oh, ow, **kwargs)
        jax.block_until_ready(y)
        y_ref = _reference(x, oh, ow)
        assert y.shape == (n, c, oh, ow)
        assert y.dtype == jnp.float32
        assert jnp.allclose(y, y_ref, atol=atol, rtol=rtol), (
            f"mismatch for {(n, c, h, w)}->{(oh, ow)} {kwargs}")

    # 1) shapes implied by the Repro module, through the module-style interface
    #    (tiny problem -> fused single-matmul path).
    x1 = jax.random.normal(keys[0], (2, 4, 8, 8), dtype=jnp.float32)
    (y1,) = repro_forward(None, None, None, x1, 16, 16)
    jax.block_until_ready(y1)
    assert y1.shape == (2, 4, 16, 16) and y1.dtype == jnp.float32
    assert jnp.allclose(y1, _reference(x1, 16, 16), atol=1e-5, rtol=1e-5)

    # 2) separable path, lane-dense output (out_w = 128), NC not a multiple of 8.
    run_case(keys[1], 1, 3, 16, 64, 32, 128)

    # 3) forced separable path with a tiny budget: multi-step ragged NC grid and
    #    lane-padding of out_w (32 -> 128) for unmasked stores.
    run_case(keys[2], 1, 20, 16, 16, 32, 32,
             fused_weight_limit_bytes=0, tile_budget_bytes=96 * 1024)

    # 4) optional bf16 MXU feed (f32 accumulation) -> looser tolerance.
    run_case(keys[3], 2, 4, 8, 8, 16, 16,
             compute_dtype=jnp.bfloat16, atol=5e-2, rtol=5e-2)

    # 5) larger separable case: even multi-step grid + unrolled channel loop.
    run_case(keys[4], 2, 16, 32, 256, 64, 512)

    # 6) fused path with a multi-step, ragged, even-nudged NC grid.
    run_case(keys[5], 8, 255, 8, 8, 16, 16)

    print("KERNEL_OK")
</pallas_src>

<mosaic_0001>
module attributes {stable_mosaic.version = 11 : i64} {
  func.func @_fused_kernel(%arg0: i32, %arg1: memref<8x64xf32, #tpu.memory_space<vmem>>, %arg2: memref<64x256xf32, #tpu.memory_space<vmem>>, %arg3: memref<8x256xf32, #tpu.memory_space<vmem>>) attributes {dimension_semantics = [#tpu.dimension_semantics<parallel>], iteration_bounds = array<i64: 1>, scalar_prefetch = 0 : i64, scratch_operands = 0 : i64, tpu.core_type = #tpu.core_type<tc>, window_params = [{transform_indices = @transform_0, window_bounds = array<i64: 8, 64>}, {pipeline_mode = #tpu.pipeline_mode<synchronous>, transform_indices = @transform_1, window_bounds = array<i64: 64, 256>}, {transform_indices = @transform_2, window_bounds = array<i64: 8, 256>}]} {
    %c0 = arith.constant 0 : index
    %c0_0 = arith.constant 0 : index
    %0 = vector.load %arg1[%c0, %c0_0] : memref<8x64xf32, #tpu.memory_space<vmem>>, vector<8x64xf32>
    %c0_1 = arith.constant 0 : index
    %c0_2 = arith.constant 0 : index
    %1 = vector.load %arg2[%c0_1, %c0_2] : memref<64x256xf32, #tpu.memory_space<vmem>>, vector<64x256xf32>
    %cst = arith.constant dense<0.000000e+00> : vector<8x256xf32>
    %2 = tpu.matmul %0, %1, %cst {dimension_numbers = #tpu.dot_dimension_numbers<[1], [0], [0], [1], [0, 0, 1, 1], [], []>} : vector<8x64xf32>, vector<64x256xf32>, vector<8x256xf32> -> vector<8x256xf32>
    %c0_3 = arith.constant 0 : index
    %c0_4 = arith.constant 0 : index
    %3 = vector.load %arg3[%c0_3, %c0_4] : memref<8x256xf32, #tpu.memory_space<vmem>>, vector<8x256xf32>
    tpu.vector_store %arg3[%c0_3, %c0_4], %2 {strides = array<i32>} : memref<8x256xf32, #tpu.memory_space<vmem>>, vector<8x256xf32>,
    return
  }
  func.func @transform_0(%arg0: i32) -> (i32, i32) {
    %c0_i32 = arith.constant 0 : i32
    %c0_i32_0 = arith.constant 0 : i32
    return %arg0, %c0_i32 : i32, i32
  }
  func.func @transform_1(%arg0: i32) -> (i32, i32) {
    %c0_i32 = arith.constant 0 : i32
    %c0_i32_0 = arith.constant 0 : i32
    %c0_i32_1 = arith.constant 0 : i32
    return %c0_i32, %c0_i32_0 : i32, i32
  }
  func.func @transform_2(%arg0: i32) -> (i32, i32) {
    %c0_i32 = arith.constant 0 : i32
    %c0_i32_0 = arith.constant 0 : i32
    return %arg0, %c0_i32 : i32, i32
  }
}

module attributes {stable_mosaic.version = 11 : i64} {
  func.func @_fused_kernel(%arg0: i32, %arg1: memref<8x64xf32, #tpu.memory_space<vmem>>, %arg2: memref<64x256xf32, #tpu.memory_space<vmem>>, %arg3: memref<8x256xf32, #tpu.memory_space<vmem>>) attributes {dimension_semantics = [#tpu.dimension_semantics<parallel>], iteration_bounds = array<i64: 1>, scalar_prefetch = 0 : i64, scratch_operands = 0 : i64, tpu.core_type = #tpu.core_type<tc>, window_params = [{transform_indices = @transform_0, window_bounds = array<i64: 8, 64>}, {pipeline_mode = #tpu.pipeline_mode<synchronous>, transform_indices = @transform_1, window_bounds = array<i64: 64, 256>}, {transform_indices = @transform_2, window_bounds = array<i64: 8, 256>}]} {
    %c0 = arith.constant 0 : index
    %c0_0 = arith.constant 0 : index
    %0 = vector.load %arg1[%c0, %c0_0] : memref<8x64xf32, #tpu.memory_space<vmem>>, vector<8x64xf32>
    %c0_1 = arith.constant 0 : index
    %c0_2 = arith.constant 0 : index
    %1 = vector.load %arg2[%c0_1, %c0_2] : memref<64x256xf32, #tpu.memory_space<vmem>>, vector<64x256xf32>
    %cst = arith.constant dense<0.000000e+00> : vector<8x256xf32>
    %2 = tpu.matmul %0, %1, %cst {dimension_numbers = #tpu.dot_dimension_numbers<[1], [0], [0], [1], [0, 0, 1, 1], [], []>} : vector<8x64xf32>, vector<64x256xf32>, vector<8x256xf32> -> vector<8x256xf32>
    %c0_3 = arith.constant 0 : index
    %c0_4 = arith.constant 0 : index
    %3 = vector.load %arg3[%c0_3, %c0_4] : memref<8x256xf32, #tpu.memory_space<vmem>>, vector<8x256xf32>
    tpu.vector_store %arg3[%c0_3, %c0_4], %2 {strides = array<i32>} : memref<8x256xf32, #tpu.memory_space<vmem>>, vector<8x256xf32>,
    return
  }
  func.func @transform_0(%arg0: i32) -> (i32, i32) {
    %c0_i32 = arith.constant 0 : i32
    %c0_i32_0 = arith.constant 0 : i32
    return %arg0, %c0_i32 : i32, i32
  }
  func.func @transform_1(%arg0: i32) -> (i32, i32) {
    %c0_i32 = arith.constant 0 : i32
    %c0_i32_0 = arith.constant 0 : i32
    %c0_i32_1 = arith.constant 0 : i32
    return %c0_i32, %c0_i32_0 : i32, i32
  }
  func.func @transform_2(%arg0: i32) -> (i32, i32) {
    %c0_i32 = arith.constant 0 : i32
    %c0_i32_0 = arith.constant 0 : i32
    return %arg0, %c0_i32 : i32, i32
  }
}

</mosaic_0001>

<llo_original>
// kernel: tpu_custom_call.1
$region0: #{tpu_custom_call.1}
  #allocation0 [shape = 'u32[]', space=smem, size = 0x4, offset = 0x4, fixed_abs, tag = 'smem constant byte address 0x4 - core index']
  #allocation1 [shape = 'u32[144,128]{1,0:T(1,128)}', space=vmem, size = 0x12000, scoped, tag = 'internal scratch']
  %s0 = inlined_call_operand.hbm [shape: f32[8,64], index: 0, kind: input, shape index: {}]
  %s1 = inlined_call_operand.hbm [shape: f32[64,256], index: 1, kind: input, shape index: {}]
  %s2 = inlined_call_operand.hbm [shape: f32[8,256], index: 2, kind: output, shape index: {}]
  %s3 = sld [smem:[#allocation0]]
  $region26: #{tpu_custom_call.1} parent=0
    _
  %s5 = ssub.s32 1, %s3
  %s6 = scalar_select 0, %s5, %s3
  $region1: #{tpu_custom_call.1} parent=0
    #allocation2 [shape = 'u8[4096]{0}', space=vmem, size = 0x1000, scoped, tag = 'input window, operand 0, single buffered']
    #allocation3 [shape = 's32[1]{0}', space=sflag, size = 0x4, scoped, tag = 'scoped memory for tpu_custom_call.1']
    #allocation4 [shape = 's32[1]{0}', space=sflag, size = 0x4, scoped, tag = 'scoped memory for tpu_custom_call.1']
    #allocation5 [shape = 'u8[65536]{0}', space=vmem, size = 0x10000, scoped, tag = 'input window, operand 1, single buffered']
    #allocation6 [shape = 's32[1]{0}', space=sflag, size = 0x4, scoped, tag = 'scoped memory for tpu_custom_call.1']
    #allocation7 [shape = 'u8[8192]{0}', space=vmem, size = 0x2000, scoped, tag = 'output window, operand 0, single buffered']
    %7 = vsyncpa [#allocation3], 0
    %8 = vsyncpa [#allocation6], 0
    %9 = vsyncpa [#allocation4], 0
    // Predicated region
    $region2: #{tpu_custom_call.1} parent=1 // pred_check
      _
    $region3: #{tpu_custom_call.1} parent=1 // pred_check_branch
      %11 = sbr.rel (0) target = $region5
    $region4: #{tpu_custom_call.1} parent=1 // pred_region
      %s13 = ssub.s32 128, 128
      %14 = vsyncadd [#allocation3], %s13
      %s16 = sshll.u32 [#allocation2], 4
      %s17 = int_to_ptr.vmem [resolvable:$true] %s16
      %19 = dma.hbm_to_vmem [thread:$0]  %s0, 128, %s17, [#allocation3]
    $region5: #{tpu_custom_call.1} parent=1 // pred_fallthru
      _
    // Predicated region
    $region6: #{tpu_custom_call.1} parent=1 // pred_check
      _
    $region7: #{tpu_custom_call.1} parent=1 // pred_check_branch
      %21 = sbr.rel (0) target = $region9
    $region8: #{tpu_custom_call.1} parent=1 // pred_region
      %s23 = ssub.s32 2048, 2048
      %24 = vsyncadd [#allocation6], %s23
      %s25 = sshll.u32 [#allocation5], 4
      %s26 = int_to_ptr.vmem [resolvable:$true] %s25
      %31 = dma.hbm_to_vmem [thread:$0]  %s1, 2048, %s26, [#allocation6], 256, 256, 16
    $region9: #{tpu_custom_call.1} parent=1 // pred_fallthru
      _
    // Predicated region
    $region10: #{tpu_custom_call.1} parent=1 // pred_check
      _
    $region11: #{tpu_custom_call.1} parent=1 // pred_check_branch
      %33 = sbr.rel (0) target = $region13
    $region12: #{tpu_custom_call.1} parent=1 // pred_region
      %34 = dma.done [#allocation3], 128
    $region13: #{tpu_custom_call.1} parent=1 // pred_fallthru
      _
    // Predicated region
    $region14: #{tpu_custom_call.1} parent=1 // pred_check
      _
    $region15: #{tpu_custom_call.1} parent=1 // pred_check_branch
      %36 = sbr.rel (0) target = $region17
    $region16: #{tpu_custom_call.1} parent=1 // pred_region
      %37 = dma.done [#allocation6], 2048
    $region17: #{tpu_custom_call.1} parent=1 // pred_fallthru
      _
    %v38 = vld [vmem:[#allocation2] sm:$0xff]
    %v39 = vld [vmem:[#allocation5] sm:$0xff]
    %v40 = vld [vmem:[#allocation5 + $0x8] sm:$0xff]
    %v41 = vld [vmem:[#allocation5 + $0x10] sm:$0xff]
    %v42 = vld [vmem:[#allocation5 + $0x18] sm:$0xff]
    %v43 = vld [vmem:[#allocation5 + $0x20] sm:$0xff]
    %v44 = vld [vmem:[#allocation5 + $0x28] sm:$0xff]
    %v45 = vld [vmem:[#allocation5 + $0x30] sm:$0xff]
    %v46 = vld [vmem:[#allocation5 + $0x38] sm:$0xff]
    %v47 = vld [vmem:[#allocation5 + $0x40] sm:$0xff]
    %v48 = vld [vmem:[#allocation5 + $0x48] sm:$0xff]
    %v49 = vld [vmem:[#allocation5 + $0x50] sm:$0xff]
    %v50 = vld [vmem:[#allocation5 + $0x58] sm:$0xff]
    %v51 = vld [vmem:[#allocation5 + $0x60] sm:$0xff]
    %v52 = vld [vmem:[#allocation5 + $0x68] sm:$0xff]
    %v53 = vld [vmem:[#allocation5 + $0x70] sm:$0xff]
    %v54 = vld [vmem:[#allocation5 + $0x78] sm:$0xff]
    %vm55 = vcmask 523264
    %v57 = vsel %vm55, %v38, 0
    %59 = vmatprep.subr.mxu0 0.0
    %60 = vmatpush1.msra.mxu0 0.0
    %61 = vmatprep.subr.mxu0 0.0
    %62 = vmatpush1.msra.mxu0 0.0
    %63 = vmatprep.subr.mxu0 0.0
    %64 = vmatpush1.msra.mxu0 0.0
    %65 = vmatprep.subr.mxu0 0.0
    %66 = vmatpush1.msra.mxu0 0.0
    %67 = vmatprep.subr.mxu0 0.0
    %68 = vmatpush1.msra.mxu0 0.0
    %69 = vmatprep.subr.mxu0 0.0
    %70 = vmatpush1.msra.mxu0 0.0
    %71 = vmatprep.subr.mxu0 0.0
    %72 = vmatpush1.msra.mxu0 0.0
    %73 = vmatprep.subr.mxu0 0.0
    %74 = vmatpush1.msra.mxu0 0.0
    %75 = vmatprep.subr.mxu0 %v54
    %76 = vmatpush1.msra.mxu0 %v53
    %77 = vmatprep.subr.mxu0 %v52
    %78 = vmatpush1.msra.mxu0 %v51
    %79 = vmatprep.subr.mxu0 %v50
    %80 = vmatpush1.msra.mxu0 %v49
    %81 = vmatprep.subr.mxu0 %v48
    %82 = vmatpush1.msra.mxu0 %v47
    %83 = vmatprep.subr.mxu0 %v46
    %84 = vmatpush1.msra.mxu0 %v45
    %85 = vmatprep.subr.mxu0 %v44
    %86 = vmatpush1.msra.mxu0 %v43
    %87 = vmatprep.subr.mxu0 %v42
    %88 = vmatpush1.msra.mxu0 %v41
    %89 = vmatprep.subr.mxu0 %v40
    %90 = vmatpush1.msra.mxu0 %v39
    %91 = vmatprep.subr.mxu0 0.0
    %92 = vmatpush2.msra.mxu0 0.0
    %93 = vmatprep.subr.mxu0 0.0
    %94 = vmatpush2.msra.mxu0 0.0
    %95 = vmatprep.subr.mxu0 0.0
    %96 = vmatpush2.msra.mxu0 0.0
    %97 = vmatprep.subr.mxu0 0.0
    %98 = vmatpush2.msra.mxu0 0.0
    %99 = vmatprep.subr.mxu0 0.0
    %100 = vmatpush2.msra.mxu0 0.0
    %101 = vmatprep.subr.mxu0 0.0
    %102 = vmatpush2.msra.mxu0 0.0
    %103 = vmatprep.subr.mxu0 0.0
    %104 = vmatpush2.msra.mxu0 0.0
    %105 = vmatprep.subr.mxu0 0.0
    %106 = vmatpush2.msra.mxu0 0.0
    %107 = vmatprep.subr.mxu0 0.0
    %108 = vmatpush2.msra.mxu0 0.0
    %109 = vmatprep.subr.mxu0 0.0
    %110 = vmatpush2.msra.mxu0 0.0
    %111 = vmatprep.subr.mxu0 0.0
    %112 = vmatpush2.msra.mxu0 0.0
    %113 = vmatprep.subr.mxu0 0.0
    %114 = vmatpush2.msra.mxu0 0.0
    %115 = vmatprep.subr.mxu0 0.0
    %116 = vmatpush2.msra.mxu0 0.0
    %117 = vmatprep.subr.mxu0 0.0
    %118 = vmatpush2.msra.mxu0 0.0
    %119 = vmatprep.subr.mxu0 0.0
    %120 = vmatpush2.msra.mxu0 0.0
    %121 = vmatprep.subr.mxu0 0.0
    %122 = vmatpush2.msra.mxu0 0.0
    %123 = vmatprep.mubr.f32.mxu0 0.0
    %124 = vmatmul.mubr.f32.gmra.mxu0 %v57
    %v125 = vpop.f32.mrf.mxu0
    %v126 = vadd.f32 0.0, %v125
    %v127 = vpop.f32.mrf.mxu0
    %v128 = vadd.f32 0.0, %v127
    %129 = vdwg.mxu0
    %130 = vst [vmem:[#allocation7] sm:$0xff] %v126
    %131 = vst [vmem:[#allocation7 + $0x8] sm:$0xff] %v128
    // Predicated region
    $region18: #{tpu_custom_call.1} parent=1 // pred_check
      _
    $region19: #{tpu_custom_call.1} parent=1 // pred_check_branch
      %133 = sbr.rel (0) target = $region21
    $region20: #{tpu_custom_call.1} parent=1 // pred_region
      %s135 = ssub.s32 256, 256
      %136 = vsyncadd [#allocation4], %s135
      %s138 = sshll.u32 [#allocation7], 4
      %s139 = int_to_ptr.vmem [resolvable:$true] %s138
      %141 = dma.vmem_to_hbm [thread:$0]  %s139, 256, %s2, [#allocation4]
    $region21: #{tpu_custom_call.1} parent=1 // pred_fallthru
      _
    // Predicated region
    $region22: #{tpu_custom_call.1} parent=1 // pred_check
      _
    $region23: #{tpu_custom_call.1} parent=1 // pred_check_branch
      %143 = sbr.rel (0) target = $region25
    $region24: #{tpu_custom_call.1} parent=1 // pred_region
      %144 = dma.done [#allocation4], 256
    $region25: #{tpu_custom_call.1} parent=1 // pred_fallthru
      _
    %145 = vsyncpa [#allocation3], 1
    %146 = vsyncpa [#allocation6], 1
    %147 = vsyncpa [#allocation4], 1

// kernel: tpu_custom_call.1
$region0: #{tpu_custom_call.1}
  #allocation0 [shape = 'u32[]', space=smem, size = 0x4, offset = 0x4, fixed_abs, tag = 'smem constant byte address 0x4 - core index']
  #allocation1 [shape = 'u32[144,128]{1,0:T(1,128)}', space=vmem, size = 0x12000, scoped, tag = 'internal scratch']
  %s0 = inlined_call_operand.hbm [shape: f32[8,64], index: 0, kind: input, shape index: {}]
  %s1 = inlined_call_operand.hbm [shape: f32[64,256], index: 1, kind: input, shape index: {}]
  %s2 = inlined_call_operand.hbm [shape: f32[8,256], index: 2, kind: output, shape index: {}]
  %s3 = sld [smem:[#allocation0]]
  $region26: #{tpu_custom_call.1} parent=0
    _
  %s5 = ssub.s32 1, %s3
  %s6 = scalar_select 0, %s5, %s3
  $region1: #{tpu_custom_call.1} parent=0
    #allocation2 [shape = 'u8[4096]{0}', space=vmem, size = 0x1000, scoped, tag = 'input window, operand 0, single buffered']
    #allocation3 [shape = 's32[1]{0}', space=sflag, size = 0x4, scoped, tag = 'scoped memory for tpu_custom_call.1']
    #allocation4 [shape = 's32[1]{0}', space=sflag, size = 0x4, scoped, tag = 'scoped memory for tpu_custom_call.1']
    #allocation5 [shape = 'u8[65536]{0}', space=vmem, size = 0x10000, scoped, tag = 'input window, operand 1, single buffered']
    #allocation6 [shape = 's32[1]{0}', space=sflag, size = 0x4, scoped, tag = 'scoped memory for tpu_custom_call.1']
    #allocation7 [shape = 'u8[8192]{0}', space=vmem, size = 0x2000, scoped, tag = 'output window, operand 0, single buffered']
    %7 = vsyncpa [#allocation3], 0
    %8 = vsyncpa [#allocation6], 0
    %9 = vsyncpa [#allocation4], 0
    // Predicated region
    $region2: #{tpu_custom_call.1} parent=1 // pred_check
      _
    $region3: #{tpu_custom_call.1} parent=1 // pred_check_branch
      %11 = sbr.rel (0) target = $region5
    $region4: #{tpu_custom_call.1} parent=1 // pred_region
      %s13 = ssub.s32 128, 128
      %14 = vsyncadd [#allocation3], %s13
      %s16 = sshll.u32 [#allocation2], 4
      %s17 = int_to_ptr.vmem [resolvable:$true] %s16
      %19 = dma.hbm_to_vmem [thread:$0]  %s0, 128, %s17, [#allocation3]
    $region5: #{tpu_custom_call.1} parent=1 // pred_fallthru
      _
    // Predicated region
    $region6: #{tpu_custom_call.1} parent=1 // pred_check
      _
    $region7: #{tpu_custom_call.1} parent=1 // pred_check_branch
      %21 = sbr.rel (0) target = $region9
    $region8: #{tpu_custom_call.1} parent=1 // pred_region
      %s23 = ssub.s32 2048, 2048
      %24 = vsyncadd [#allocation6], %s23
      %s25 = sshll.u32 [#allocation5], 4
      %s26 = int_to_ptr.vmem [resolvable:$true] %s25
      %31 = dma.hbm_to_vmem [thread:$0]  %s1, 2048, %s26, [#allocation6], 256, 256, 16
    $region9: #{tpu_custom_call.1} parent=1 // pred_fallthru
      _
    // Predicated region
    $region10: #{tpu_custom_call.1} parent=1 // pred_check
      _
    $region11: #{tpu_custom_call.1} parent=1 // pred_check_branch
      %33 = sbr.rel (0) target = $region13
    $region12: #{tpu_custom_call.1} parent=1 // pred_region
      %34 = dma.done [#allocation3], 128
    $region13: #{tpu_custom_call.1} parent=1 // pred_fallthru
      _
    // Predicated region
    $region14: #{tpu_custom_call.1} parent=1 // pred_check
      _
    $region15: #{tpu_custom_call.1} parent=1 // pred_check_branch
      %36 = sbr.rel (0) target = $region17
    $region16: #{tpu_custom_call.1} parent=1 // pred_region
      %37 = dma.done [#allocation6], 2048
    $region17: #{tpu_custom_call.1} parent=1 // pred_fallthru
      _
    %v38 = vld [vmem:[#allocation2] sm:$0xff]
    %v39 = vld [vmem:[#allocation5] sm:$0xff]
    %v40 = vld [vmem:[#allocation5 + $0x8] sm:$0xff]
    %v41 = vld [vmem:[#allocation5 + $0x10] sm:$0xff]
    %v42 = vld [vmem:[#allocation5 + $0x18] sm:$0xff]
    %v43 = vld [vmem:[#allocation5 + $0x20] sm:$0xff]
    %v44 = vld [vmem:[#allocation5 + $0x28] sm:$0xff]
    %v45 = vld [vmem:[#allocation5 + $0x30] sm:$0xff]
    %v46 = vld [vmem:[#allocation5 + $0x38] sm:$0xff]
    %v47 = vld [vmem:[#allocation5 + $0x40] sm:$0xff]
    %v48 = vld [vmem:[#allocation5 + $0x48] sm:$0xff]
    %v49 = vld [vmem:[#allocation5 + $0x50] sm:$0xff]
    %v50 = vld [vmem:[#allocation5 + $0x58] sm:$0xff]
    %v51 = vld [vmem:[#allocation5 + $0x60] sm:$0xff]
    %v52 = vld [vmem:[#allocation5 + $0x68] sm:$0xff]
    %v53 = vld [vmem:[#allocation5 + $0x70] sm:$0xff]
    %v54 = vld [vmem:[#allocation5 + $0x78] sm:$0xff]
    %vm55 = vcmask 523264
    %v57 = vsel %vm55, %v38, 0
    %59 = vmatprep.subr.mxu0 0.0
    %60 = vmatpush1.msra.mxu0 0.0
    %61 = vmatprep.subr.mxu0 0.0
    %62 = vmatpush1.msra.mxu0 0.0
    %63 = vmatprep.subr.mxu0 0.0
    %64 = vmatpush1.msra.mxu0 0.0
    %65 = vmatprep.subr.mxu0 0.0
    %66 = vmatpush1.msra.mxu0 0.0
    %67 = vmatprep.subr.mxu0 0.0
    %68 = vmatpush1.msra.mxu0 0.0
    %69 = vmatprep.subr.mxu0 0.0
    %70 = vmatpush1.msra.mxu0 0.0
    %71 = vmatprep.subr.mxu0 0.0
    %72 = vmatpush1.msra.mxu0 0.0
    %73 = vmatprep.subr.mxu0 0.0
    %74 = vmatpush1.msra.mxu0 0.0
    %75 = vmatprep.subr.mxu0 %v54
    %76 = vmatpush1.msra.mxu0 %v53
    %77 = vmatprep.subr.mxu0 %v52
    %78 = vmatpush1.msra.mxu0 %v51
    %79 = vmatprep.subr.mxu0 %v50
    %80 = vmatpush1.msra.mxu0 %v49
    %81 = vmatprep.subr.mxu0 %v48
    %82 = vmatpush1.msra.mxu0 %v47
    %83 = vmatprep.subr.mxu0 %v46
    %84 = vmatpush1.msra.mxu0 %v45
    %85 = vmatprep.subr.mxu0 %v44
    %86 = vmatpush1.msra.mxu0 %v43
    %87 = vmatprep.subr.mxu0 %v42
    %88 = vmatpush1.msra.mxu0 %v41
    %89 = vmatprep.subr.mxu0 %v40
    %90 = vmatpush1.msra.mxu0 %v39
    %91 = vmatprep.subr.mxu0 0.0
    %92 = vmatpush2.msra.mxu0 0.0
    %93 = vmatprep.subr.mxu0 0.0
    %94 = vmatpush2.msra.mxu0 0.0
    %95 = vmatprep.subr.mxu0 0.0
    %96 = vmatpush2.msra.mxu0 0.0
    %97 = vmatprep.subr.mxu0 0.0
    %98 = vmatpush2.msra.mxu0 0.0
    %99 = vmatprep.subr.mxu0 0.0
    %100 = vmatpush2.msra.mxu0 0.0
    %101 = vmatprep.subr.mxu0 0.0
    %102 = vmatpush2.msra.mxu0 0.0
    %103 = vmatprep.subr.mxu0 0.0
    %104 = vmatpush2.msra.mxu0 0.0
    %105 = vmatprep.subr.mxu0 0.0
    %106 = vmatpush2.msra.mxu0 0.0
    %107 = vmatprep.subr.mxu0 0.0
    %108 = vmatpush2.msra.mxu0 0.0
    %109 = vmatprep.subr.mxu0 0.0
    %110 = vmatpush2.msra.mxu0 0.0
    %111 = vmatprep.subr.mxu0 0.0
    %112 = vmatpush2.msra.mxu0 0.0
    %113 = vmatprep.subr.mxu0 0.0
    %114 = vmatpush2.msra.mxu0 0.0
    %115 = vmatprep.subr.mxu0 0.0
    %116 = vmatpush2.msra.mxu0 0.0
    %117 = vmatprep.subr.mxu0 0.0
    %118 = vmatpush2.msra.mxu0 0.0
    %119 = vmatprep.subr.mxu0 0.0
    %120 = vmatpush2.msra.mxu0 0.0
    %121 = vmatprep.subr.mxu0 0.0
    %122 = vmatpush2.msra.mxu0 0.0
    %123 = vmatprep.mubr.f32.mxu0 0.0
    %124 = vmatmul.mubr.f32.gmra.mxu0 %v57
    %v125 = vpop.f32.mrf.mxu0
    %v126 = vadd.f32 0.0, %v125
    %v127 = vpop.f32.mrf.mxu0
    %v128 = vadd.f32 0.0, %v127
    %129 = vdwg.mxu0
    %130 = vst [vmem:[#allocation7] sm:$0xff] %v126
    %131 = vst [vmem:[#allocation7 + $0x8] sm:$0xff] %v128
    // Predicated region
    $region18: #{tpu_custom_call.1} parent=1 // pred_check
      _
    $region19: #{tpu_custom_call.1} parent=1 // pred_check_branch
      %133 = sbr.rel (0) target = $region21
    $region20: #{tpu_custom_call.1} parent=1 // pred_region
      %s135 = ssub.s32 256, 256
      %136 = vsyncadd [#allocation4], %s135
      %s138 = sshll.u32 [#allocation7], 4
      %s139 = int_to_ptr.vmem [resolvable:$true] %s138
      %141 = dma.vmem_to_hbm [thread:$0]  %s139, 256, %s2, [#allocation4]
    $region21: #{tpu_custom_call.1} parent=1 // pred_fallthru
      _
    // Predicated region
    $region22: #{tpu_custom_call.1} parent=1 // pred_check
      _
    $region23: #{tpu_custom_call.1} parent=1 // pred_check_branch
      %143 = sbr.rel (0) target = $region25
    $region24: #{tpu_custom_call.1} parent=1 // pred_region
      %144 = dma.done [#allocation4], 256
    $region25: #{tpu_custom_call.1} parent=1 // pred_fallthru
      _
    %145 = vsyncpa [#allocation3], 1
    %146 = vsyncpa [#allocation6], 1
    %147 = vsyncpa [#allocation4], 1

</llo_original>
